<compile_context>
chip_gen: v6e
topology: v6e:2x2x1
jax: 0.10.0
libtpu: 0.0.40
codegen_flags: <defaults>
</compile_context>

<pallas_src>
import math

import jax
import jax.numpy as jnp
from jax.experimental import pallas as pl
from jax.experimental.pallas import tpu as pltpu


_LANE = 128
_SUBLANE = 8
# Per-step block-byte budget (all inputs + outputs of one grid step, before the
# 2x double-buffering).  Keeps the pipelined working set well under v7x's
# 64 MiB VMEM while still being large enough (>= several hundred lanes) to sit
# near the HBM roofline for realistic shapes.
_BLOCK_BYTES_BUDGET = 2 << 20


def _pick_tiles(B, F, total_n, itemsize):
    """Pick (batch_tile, feature_tile) honoring (8,128) rules + VMEM budget."""

    def step_bytes(tb, tf):
        # One grid step touches total_n input tiles and total_n output rows.
        return 2 * total_n * tb * tf * itemsize

    # Feature tile: full extent if it fits (or if F is not lane aligned, where
    # a full-extent block is the only legal choice); otherwise the largest
    # power-of-two multiple of 128 that divides F and fits the budget.
    if F % _LANE != 0 or step_bytes(B, F) <= _BLOCK_BYTES_BUDGET:
        tf = F
    else:
        tf = _LANE
        cand = _LANE * 2
        while cand < F:
            if F % cand == 0 and step_bytes(B, cand) <= _BLOCK_BYTES_BUDGET:
                tf = cand
            cand *= 2

    # Batch tile: only shrink (in sublane multiples) if a single feature tile
    # is still over budget (very large batches).
    tb = B
    while step_bytes(tb, tf) > _BLOCK_BYTES_BUDGET and tb % (2 * _SUBLANE) == 0:
        tb //= 2
    return tb, tf


def _make_stack_kernel(group_sizes):
    """Kernel: copy each (tb, tf) input tile into slot i of its (tb, n, tf) output."""
    n_in = sum(group_sizes)

    def kernel(*refs):
        in_refs = refs[:n_in]
        out_refs = refs[n_in:]
        off = 0
        for n, out_ref in zip(group_sizes, out_refs):
            for i in range(n):
                # Last dim (tf, lane axis) is dense -> lane-dense vector stores.
                out_ref[:, i, :] = in_refs[off + i][...]
            off += n

    return kernel


def _stack_groups(groups, feature_tile=None):
    """Pallas torch.stack(g, dim=1) for one or more groups in a single call.

    All items across all groups must share the same shape and dtype (the
    caller falls back to per-group calls otherwise).  Returns one stacked
    array per group, each of shape (B, len(group), *feat_shape).
    """
    groups = [tuple(g) for g in groups]
    ref = groups[0][0]
    shape, dtype = ref.shape, ref.dtype
    for g in groups:
        for t in g:
            assert t.shape == shape and t.dtype == dtype, \
                "stack inputs must share shape and dtype"

    B = shape[0]
    feat_shape = shape[1:]
    F = math.prod(feat_shape) if feat_shape else 1

    # Lane-dense layout: flatten trailing dims (pure reshape, no data movement).
    flat_inputs = [t.reshape(B, F) for g in groups for t in g]

    itemsize = jnp.dtype(dtype).itemsize
    group_sizes = tuple(len(g) for g in groups)
    total_n = sum(group_sizes)

    if feature_tile is not None:
        tb, tf = B, feature_tile
    else:
        tb, tf = _pick_tiles(B, F, total_n, itemsize)
    assert F % tf == 0, "feature_tile must divide the flattened feature size"
    assert B % tb == 0

    grid = (B // tb, F // tf)

    in_specs = [pl.BlockSpec((tb, tf), lambda b, f: (b, f))
                for _ in range(total_n)]
    out_specs = tuple(pl.BlockSpec((tb, n, tf), lambda b, f: (b, 0, f))
                      for n in group_sizes)
    out_shape = tuple(jax.ShapeDtypeStruct((B, n, F), dtype)
                      for n in group_sizes)

    outs = pl.pallas_call(
        _make_stack_kernel(group_sizes),
        grid=grid,
        in_specs=in_specs,
        out_specs=out_specs,
        out_shape=out_shape,
        compiler_params=pltpu.CompilerParams(
            dimension_semantics=("parallel", "parallel"),  # shards across TCs on v7x
            vmem_limit_bytes=32 << 20,                     # explicit; safe on v5e/v6e/v7x
        ),
    )(*flat_inputs)

    outs = jax.tree_util.tree_leaves(outs)
    return [o.reshape((B, n) + feat_shape) for o, n in zip(outs, group_sizes)]


def initializer_block_forward(keys, values, feature_tile=None):
    """JAX/Pallas equivalent of InitializerBlock.forward given (keys, values).

    keys / values may each be a tuple/list of (B, C, H, W) arrays (-> stacked
    along a new axis 1) or a single (B, C, H, W) array (-> unsqueezed at 1).
    """
    if isinstance(keys, (tuple, list)) and isinstance(values, (tuple, list)):
        keys = tuple(keys)
        values = tuple(values)
    else:
        # torch.unsqueeze(x, 1) == stack of a single element along axis 1
        keys = (keys,)
        values = (values,)

    same_item = (keys[0].shape == values[0].shape
                 and keys[0].dtype == values[0].dtype)
    if same_item:
        # Fused: one pallas_call stacks both keys and values.
        out_k, out_v = _stack_groups([keys, values], feature_tile=feature_tile)
    else:
        # Different per-item shapes/dtypes -> separate calls.
        (out_k,) = _stack_groups([keys], feature_tile=feature_tile)
        (out_v,) = _stack_groups([values], feature_tile=feature_tile)
    return out_k, out_v


if __name__ == "__main__":
    key = jax.random.PRNGKey(0)
    B, C, H, W = 2, 4, 16, 16
    n_stack = 3

    subkeys = jax.random.split(key, 2 * n_stack + 2)

    # Case 1: keys/values are tuples -> torch.stack(..., dim=1) semantics.
    keys_list = tuple(
        jax.random.normal(subkeys[i], (B, C, H, W), dtype=jnp.float32)
        for i in range(n_stack)
    )
    values_list = tuple(
        jax.random.normal(subkeys[n_stack + i], (B, C, H, W), dtype=jnp.float32)
        for i in range(n_stack)
    )
    out_k, out_v = initializer_block_forward(keys_list, values_list)
    out_k = jax.block_until_ready(out_k)
    out_v = jax.block_until_ready(out_v)

    ref_k = jnp.stack(keys_list, axis=1)
    ref_v = jnp.stack(values_list, axis=1)
    assert out_k.shape == (B, n_stack, C, H, W)
    assert out_v.shape == (B, n_stack, C, H, W)
    assert jnp.allclose(out_k, ref_k)
    assert jnp.allclose(out_v, ref_v)

    # Case 2: keys/values are single tensors -> torch.unsqueeze(..., 1).
    k_single = jax.random.normal(subkeys[-2], (B, C, H, W), dtype=jnp.float32)
    v_single = jax.random.normal(subkeys[-1], (B, C, H, W), dtype=jnp.float32)
    out_k1, out_v1 = initializer_block_forward(k_single, v_single)
    out_k1 = jax.block_until_ready(out_k1)
    out_v1 = jax.block_until_ready(out_v1)

    assert out_k1.shape == (B, 1, C, H, W)
    assert out_v1.shape == (B, 1, C, H, W)
    assert jnp.allclose(out_k1, k_single[:, None])
    assert jnp.allclose(out_v1, v_single[:, None])

    # Case 3: force a multi-step feature grid (tf=256 -> grid=(1,4)) to
    # exercise the pipelined/tiled path used for large tensors.
    out_k2, out_v2 = initializer_block_forward(keys_list, values_list,
                                               feature_tile=256)
    out_k2 = jax.block_until_ready(out_k2)
    out_v2 = jax.block_until_ready(out_v2)
    assert jnp.allclose(out_k2, ref_k)
    assert jnp.allclose(out_v2, ref_v)

    print("KERNEL_OK")
</pallas_src>

<mosaic_0001>
module attributes {stable_mosaic.version = 11 : i64} {
  func.func @kernel(%arg0: i32, %arg1: i32, %arg2: memref<2x1024xf32, #tpu.memory_space<vmem>>, %arg3: memref<2x1024xf32, #tpu.memory_space<vmem>>, %arg4: memref<2x1024xf32, #tpu.memory_space<vmem>>, %arg5: memref<2x1024xf32, #tpu.memory_space<vmem>>, %arg6: memref<2x1024xf32, #tpu.memory_space<vmem>>, %arg7: memref<2x1024xf32, #tpu.memory_space<vmem>>, %arg8: memref<2x3x1024xf32, #tpu.memory_space<vmem>>, %arg9: memref<2x3x1024xf32, #tpu.memory_space<vmem>>) attributes {dimension_semantics = [#tpu.dimension_semantics<parallel>, #tpu.dimension_semantics<parallel>], iteration_bounds = array<i64: 1, 1>, scalar_prefetch = 0 : i64, scratch_operands = 0 : i64, tpu.core_type = #tpu.core_type<tc>, window_params = [{transform_indices = @transform_0, window_bounds = array<i64: 2, 1024>}, {transform_indices = @transform_1, window_bounds = array<i64: 2, 1024>}, {transform_indices = @transform_2, window_bounds = array<i64: 2, 1024>}, {transform_indices = @transform_3, window_bounds = array<i64: 2, 1024>}, {transform_indices = @transform_4, window_bounds = array<i64: 2, 1024>}, {transform_indices = @transform_5, window_bounds = array<i64: 2, 1024>}, {transform_indices = @transform_6, window_bounds = array<i64: 2, 3, 1024>}, {transform_indices = @transform_7, window_bounds = array<i64: 2, 3, 1024>}]} {
    %c0 = arith.constant 0 : index
    %c0_0 = arith.constant 0 : index
    %0 = vector.load %arg2[%c0, %c0_0] : memref<2x1024xf32, #tpu.memory_space<vmem>>, vector<2x1024xf32>
    %c0_1 = arith.constant 0 : index
    %c0_2 = arith.constant 0 : index
    %c0_3 = arith.constant 0 : index
    %1 = vector.load %arg8[%c0_1, %c0_2, %c0_3] : memref<2x3x1024xf32, #tpu.memory_space<vmem>>, vector<2x1x1024xf32>
    %2 = vector.shape_cast %1 : vector<2x1x1024xf32> to vector<2x1024xf32>
    %3 = vector.shape_cast %0 : vector<2x1024xf32> to vector<2x1x1024xf32>
    tpu.vector_store %arg8[%c0_1, %c0_2, %c0_3], %3 {strides = array<i32>} : memref<2x3x1024xf32, #tpu.memory_space<vmem>>, vector<2x1x1024xf32>,
    %c0_4 = arith.constant 0 : index
    %c0_5 = arith.constant 0 : index
    %4 = vector.load %arg3[%c0_4, %c0_5] : memref<2x1024xf32, #tpu.memory_space<vmem>>, vector<2x1024xf32>
    %c0_6 = arith.constant 0 : index
    %c1 = arith.constant 1 : index
    %c0_7 = arith.constant 0 : index
    %5 = vector.load %arg8[%c0_6, %c1, %c0_7] : memref<2x3x1024xf32, #tpu.memory_space<vmem>>, vector<2x1x1024xf32>
    %6 = vector.shape_cast %5 : vector<2x1x1024xf32> to vector<2x1024xf32>
    %7 = vector.shape_cast %4 : vector<2x1024xf32> to vector<2x1x1024xf32>
    tpu.vector_store %arg8[%c0_6, %c1, %c0_7], %7 {strides = array<i32>} : memref<2x3x1024xf32, #tpu.memory_space<vmem>>, vector<2x1x1024xf32>,
    %c0_8 = arith.constant 0 : index
    %c0_9 = arith.constant 0 : index
    %8 = vector.load %arg4[%c0_8, %c0_9] : memref<2x1024xf32, #tpu.memory_space<vmem>>, vector<2x1024xf32>
    %c0_10 = arith.constant 0 : index
    %c2 = arith.constant 2 : index
    %c0_11 = arith.constant 0 : index
    %9 = vector.load %arg8[%c0_10, %c2, %c0_11] : memref<2x3x1024xf32, #tpu.memory_space<vmem>>, vector<2x1x1024xf32>
    %10 = vector.shape_cast %9 : vector<2x1x1024xf32> to vector<2x1024xf32>
    %11 = vector.shape_cast %8 : vector<2x1024xf32> to vector<2x1x1024xf32>
    tpu.vector_store %arg8[%c0_10, %c2, %c0_11], %11 {strides = array<i32>} : memref<2x3x1024xf32, #tpu.memory_space<vmem>>, vector<2x1x1024xf32>,
    %c0_12 = arith.constant 0 : index
    %c0_13 = arith.constant 0 : index
    %12 = vector.load %arg5[%c0_12, %c0_13] : memref<2x1024xf32, #tpu.memory_space<vmem>>, vector<2x1024xf32>
    %c0_14 = arith.constant 0 : index
    %c0_15 = arith.constant 0 : index
    %c0_16 = arith.constant 0 : index
    %13 = vector.load %arg9[%c0_14, %c0_15, %c0_16] : memref<2x3x1024xf32, #tpu.memory_space<vmem>>, vector<2x1x1024xf32>
    %14 = vector.shape_cast %13 : vector<2x1x1024xf32> to vector<2x1024xf32>
    %15 = vector.shape_cast %12 : vector<2x1024xf32> to vector<2x1x1024xf32>
    tpu.vector_store %arg9[%c0_14, %c0_15, %c0_16], %15 {strides = array<i32>} : memref<2x3x1024xf32, #tpu.memory_space<vmem>>, vector<2x1x1024xf32>,
    %c0_17 = arith.constant 0 : index
    %c0_18 = arith.constant 0 : index
    %16 = vector.load %arg6[%c0_17, %c0_18] : memref<2x1024xf32, #tpu.memory_space<vmem>>, vector<2x1024xf32>
    %c0_19 = arith.constant 0 : index
    %c1_20 = arith.constant 1 : index
    %c0_21 = arith.constant 0 : index
    %17 = vector.load %arg9[%c0_19, %c1_20, %c0_21] : memref<2x3x1024xf32, #tpu.memory_space<vmem>>, vector<2x1x1024xf32>
    %18 = vector.shape_cast %17 : vector<2x1x1024xf32> to vector<2x1024xf32>
    %19 = vector.shape_cast %16 : vector<2x1024xf32> to vector<2x1x1024xf32>
    tpu.vector_store %arg9[%c0_19, %c1_20, %c0_21], %19 {strides = array<i32>} : memref<2x3x1024xf32, #tpu.memory_space<vmem>>, vector<2x1x1024xf32>,
    %c0_22 = arith.constant 0 : index
    %c0_23 = arith.constant 0 : index
    %20 = vector.load %arg7[%c0_22, %c0_23] : memref<2x1024xf32, #tpu.memory_space<vmem>>, vector<2x1024xf32>
    %c0_24 = arith.constant 0 : index
    %c2_25 = arith.constant 2 : index
    %c0_26 = arith.constant 0 : index
    %21 = vector.load %arg9[%c0_24, %c2_25, %c0_26] : memref<2x3x1024xf32, #tpu.memory_space<vmem>>, vector<2x1x1024xf32>
    %22 = vector.shape_cast %21 : vector<2x1x1024xf32> to vector<2x1024xf32>
    %23 = vector.shape_cast %20 : vector<2x1024xf32> to vector<2x1x1024xf32>
    tpu.vector_store %arg9[%c0_24, %c2_25, %c0_26], %23 {strides = array<i32>} : memref<2x3x1024xf32, #tpu.memory_space<vmem>>, vector<2x1x1024xf32>,
    return
  }
  func.func @transform_0(%arg0: i32, %arg1: i32) -> (i32, i32) {
    %c0_i32 = arith.constant 0 : i32
    return %arg0, %arg1 : i32, i32
  }
  func.func @transform_1(%arg0: i32, %arg1: i32) -> (i32, i32) {
    %c0_i32 = arith.constant 0 : i32
    return %arg0, %arg1 : i32, i32
  }
  func.func @transform_2(%arg0: i32, %arg1: i32) -> (i32, i32) {
    %c0_i32 = arith.constant 0 : i32
    return %arg0, %arg1 : i32, i32
  }
  func.func @transform_3(%arg0: i32, %arg1: i32) -> (i32, i32) {
    %c0_i32 = arith.constant 0 : i32
    return %arg0, %arg1 : i32, i32
  }
  func.func @transform_4(%arg0: i32, %arg1: i32) -> (i32, i32) {
    %c0_i32 = arith.constant 0 : i32
    return %arg0, %arg1 : i32, i32
  }
  func.func @transform_5(%arg0: i32, %arg1: i32) -> (i32, i32) {
    %c0_i32 = arith.constant 0 : i32
    return %arg0, %arg1 : i32, i32
  }
  func.func @transform_6(%arg0: i32, %arg1: i32) -> (i32, i32, i32) {
    %c0_i32 = arith.constant 0 : i32
    %c0_i32_0 = arith.constant 0 : i32
    return %arg0, %c0_i32, %arg1 : i32, i32, i32
  }
  func.func @transform_7(%arg0: i32, %arg1: i32) -> (i32, i32, i32) {
    %c0_i32 = arith.constant 0 : i32
    %c0_i32_0 = arith.constant 0 : i32
    return %arg0, %c0_i32, %arg1 : i32, i32, i32
  }
}

</mosaic_0001>

<llo_original>
// kernel: tpu_custom_call.1
$region0: #{tpu_custom_call.1}
  #allocation0 [shape = 'u32[]', space=smem, size = 0x4, offset = 0x4, fixed_abs, tag = 'smem constant byte address 0x4 - core index']
  #allocation1 [shape = 'u32[144,128]{1,0:T(1,128)}', space=vmem, size = 0x12000, scoped, tag = 'internal scratch']
  %s0 = inlined_call_operand.hbm [shape: f32[2,1024], index: 0, kind: input, shape index: {}]
  %s1 = inlined_call_operand.hbm [shape: f32[2,1024], index: 1, kind: input, shape index: {}]
  %s2 = inlined_call_operand.hbm [shape: f32[2,1024], index: 2, kind: input, shape index: {}]
  %s3 = inlined_call_operand.hbm [shape: f32[2,1024], index: 3, kind: input, shape index: {}]
  %s4 = inlined_call_operand.hbm [shape: f32[2,1024], index: 4, kind: input, shape index: {}]
  %s5 = inlined_call_operand.hbm [shape: f32[2,1024], index: 5, kind: input, shape index: {}]
  %s6 = inlined_call_operand.vmem [shape: f32[2,3,1024], index: 6, kind: output, shape index: {0}]
  %s7 = inlined_call_operand.vmem [shape: f32[2,3,1024], index: 7, kind: output, shape index: {1}]
  %8 = xla_tuple %s6, %s7
  %s9 = sld [smem:[#allocation0]]
  $region66: #{tpu_custom_call.1} parent=0
    _
  %s11 = ssub.s32 1, %s9
  %s12 = scalar_select 0, %s11, %s9
  $region1: #{tpu_custom_call.1} parent=0
    #allocation2 [shape = 'u8[8192]{0}', space=vmem, size = 0x2000, scoped, tag = 'input window, operand 0, single buffered']
    #allocation3 [shape = 's32[1]{0}', space=sflag, size = 0x4, scoped, tag = 'scoped memory for tpu_custom_call.1']
    #allocation4 [shape = 'u8[8192]{0}', space=vmem, size = 0x2000, scoped, tag = 'input window, operand 1, single buffered']
    #allocation5 [shape = 's32[1]{0}', space=sflag, size = 0x4, scoped, tag = 'scoped memory for tpu_custom_call.1']
    #allocation6 [shape = 'u8[8192]{0}', space=vmem, size = 0x2000, scoped, tag = 'input window, operand 2, single buffered']
    #allocation7 [shape = 'u8[8192]{0}', space=vmem, size = 0x2000, scoped, tag = 'input window, operand 3, single buffered']
    #allocation8 [shape = 's32[1]{0}', space=sflag, size = 0x4, scoped, tag = 'scoped memory for tpu_custom_call.1']
    #allocation9 [shape = 'u8[8192]{0}', space=vmem, size = 0x2000, scoped, tag = 'input window, operand 4, single buffered']
    #allocation10 [shape = 'u8[8192]{0}', space=vmem, size = 0x2000, scoped, tag = 'input window, operand 5, single buffered']
    #allocation11 [shape = 's32[1]{0}', space=sflag, size = 0x4, scoped, tag = 'scoped memory for tpu_custom_call.1']
    %13 = vsyncpa [#allocation3], 0
    %14 = vsyncpa [#allocation5], 0
    %15 = vsyncpa [#allocation8], 0
    %16 = vsyncpa [#allocation11], 0
    // Predicated region
    $region2: #{tpu_custom_call.1} parent=1 // pred_check
      _
    $region3: #{tpu_custom_call.1} parent=1 // pred_check_branch
      %18 = sbr.rel (0) target = $region5
    $region4: #{tpu_custom_call.1} parent=1 // pred_region
      %s20 = ssub.s32 256, 256
      %21 = vsyncadd [#allocation3], %s20
      %s23 = sshll.u32 [#allocation2], 4
      %s24 = int_to_ptr.vmem [resolvable:$true] %s23
      %26 = dma.hbm_to_vmem [thread:$0]  %s0, 256, %s24, [#allocation3]
    $region5: #{tpu_custom_call.1} parent=1 // pred_fallthru
      _
    // Predicated region
    $region6: #{tpu_custom_call.1} parent=1 // pred_check
      _
    $region7: #{tpu_custom_call.1} parent=1 // pred_check_branch
      %28 = sbr.rel (0) target = $region9
    $region8: #{tpu_custom_call.1} parent=1 // pred_region
      %s30 = ssub.s32 256, 256
      %31 = vsyncadd [#allocation5], %s30
      %s33 = sshll.u32 [#allocation4], 4
      %s34 = int_to_ptr.vmem [resolvable:$true] %s33
      %36 = dma.hbm_to_vmem [thread:$0]  %s1, 256, %s34, [#allocation5]
    $region9: #{tpu_custom_call.1} parent=1 // pred_fallthru
      _
    // Predicated region
    $region10: #{tpu_custom_call.1} parent=1 // pred_check
      _
    $region11: #{tpu_custom_call.1} parent=1 // pred_check_branch
      %38 = sbr.rel (0) target = $region13
    $region12: #{tpu_custom_call.1} parent=1 // pred_region
      %s40 = ssub.s32 256, 256
      %41 = vsyncadd [#allocation5], %s40
      %s43 = sshll.u32 [#allocation6], 4
      %s44 = int_to_ptr.vmem [resolvable:$true] %s43
      %46 = dma.hbm_to_vmem [thread:$0]  %s2, 256, %s44, [#allocation5]
    $region13: #{tpu_custom_call.1} parent=1 // pred_fallthru
      _
    // Predicated region
    $region14: #{tpu_custom_call.1} parent=1 // pred_check
      _
    $region15: #{tpu_custom_call.1} parent=1 // pred_check_branch
      %48 = sbr.rel (0) target = $region17
    $region16: #{tpu_custom_call.1} parent=1 // pred_region
      %s50 = ssub.s32 256, 256
      %51 = vsyncadd [#allocation8], %s50
      %s53 = sshll.u32 [#allocation7], 4
      %s54 = int_to_ptr.vmem [resolvable:$true] %s53
      %56 = dma.hbm_to_vmem [thread:$0]  %s3, 256, %s54, [#allocation8]
    $region17: #{tpu_custom_call.1} parent=1 // pred_fallthru
      _
    // Predicated region
    $region18: #{tpu_custom_call.1} parent=1 // pred_check
      _
    $region19: #{tpu_custom_call.1} parent=1 // pred_check_branch
      %58 = sbr.rel (0) target = $region21
    $region20: #{tpu_custom_call.1} parent=1 // pred_region
      %s60 = ssub.s32 256, 256
      %61 = vsyncadd [#allocation8], %s60
      %s63 = sshll.u32 [#allocation9], 4
      %s64 = int_to_ptr.vmem [resolvable:$true] %s63
      %66 = dma.hbm_to_vmem [thread:$0]  %s4, 256, %s64, [#allocation8]
    $region21: #{tpu_custom_call.1} parent=1 // pred_fallthru
      _
    // Predicated region
    $region22: #{tpu_custom_call.1} parent=1 // pred_check
      _
    $region23: #{tpu_custom_call.1} parent=1 // pred_check_branch
      %68 = sbr.rel (0) target = $region25
    $region24: #{tpu_custom_call.1} parent=1 // pred_region
      %s70 = ssub.s32 256, 256
      %71 = vsyncadd [#allocation11], %s70
      %s73 = sshll.u32 [#allocation10], 4
      %s74 = int_to_ptr.vmem [resolvable:$true] %s73
      %76 = dma.hbm_to_vmem [thread:$0]  %s5, 256, %s74, [#allocation11]
    $region25: #{tpu_custom_call.1} parent=1 // pred_fallthru
      _
    // Predicated region
    $region26: #{tpu_custom_call.1} parent=1 // pred_check
      _
    $region27: #{tpu_custom_call.1} parent=1 // pred_check_branch
      %78 = sbr.rel (0) target = $region29
    $region28: #{tpu_custom_call.1} parent=1 // pred_region
      %79 = dma.done [#allocation3], 256
    $region29: #{tpu_custom_call.1} parent=1 // pred_fallthru
      _
    // Predicated region
    $region30: #{tpu_custom_call.1} parent=1 // pred_check
      _
    $region31: #{tpu_custom_call.1} parent=1 // pred_check_branch
      %81 = sbr.rel (0) target = $region33
    $region32: #{tpu_custom_call.1} parent=1 // pred_region
      %82 = dma.done [#allocation5], 256
    $region33: #{tpu_custom_call.1} parent=1 // pred_fallthru
      _
    // Predicated region
    $region34: #{tpu_custom_call.1} parent=1 // pred_check
      _
    $region35: #{tpu_custom_call.1} parent=1 // pred_check_branch
      %84 = sbr.rel (0) target = $region37
    $region36: #{tpu_custom_call.1} parent=1 // pred_region
      %85 = dma.done [#allocation5], 256
    $region37: #{tpu_custom_call.1} parent=1 // pred_fallthru
      _
    // Predicated region
    $region38: #{tpu_custom_call.1} parent=1 // pred_check
      _
    $region39: #{tpu_custom_call.1} parent=1 // pred_check_branch
      %87 = sbr.rel (0) target = $region41
    $region40: #{tpu_custom_call.1} parent=1 // pred_region
      %88 = dma.done [#allocation8], 256
    $region41: #{tpu_custom_call.1} parent=1 // pred_fallthru
      _
    // Predicated region
    $region42: #{tpu_custom_call.1} parent=1 // pred_check
      _
    $region43: #{tpu_custom_call.1} parent=1 // pred_check_branch
      %90 = sbr.rel (0) target = $region45
    $region44: #{tpu_custom_call.1} parent=1 // pred_region
      %91 = dma.done [#allocation8], 256
    $region45: #{tpu_custom_call.1} parent=1 // pred_fallthru
      _
    // Predicated region
    $region46: #{tpu_custom_call.1} parent=1 // pred_check
      _
    $region47: #{tpu_custom_call.1} parent=1 // pred_check_branch
      %93 = sbr.rel (0) target = $region49
    $region48: #{tpu_custom_call.1} parent=1 // pred_region
      %94 = dma.done [#allocation11], 256
    $region49: #{tpu_custom_call.1} parent=1 // pred_fallthru
      _
    %v95 = vld [vmem:[#allocation2] sm:$0xff]
    %v96 = vld [vmem:[#allocation2 + $0x8] sm:$0xff]
    %v100 = vunpack.c.l.s4 1966171168
    %v101 = vunpack.c.0.s8 %v100
    %v102 = vlaneseq
    %v103 = vshrl.u32 %v102, 7
    %v104 = vsub.s32 %v101, %v103
    %v105 = vrot.slane %v95, %v104
    %v107 = vunpack.c.l.s4 1966171168
    %v108 = vunpack.c.0.s8 %v107
    %v109 = vlaneseq
    %v110 = vshrl.u32 %v109, 7
    %v111 = vsub.s32 %v108, %v110
    %v112 = vrot.slane %v96, %v111
    %v113 = vcombine.low %v105, %v112
    %v114 = vcombine.high %v105, %v112
    %117 = vst [vmem:[%s6] ss:$4 sm:$0xff] %v113
    %s118 = scalar_lea.vmem %s6, 32
    %119 = vst [vmem:[%s118] ss:$4 sm:$0xff] %v114
    %v120 = vld [vmem:[#allocation4] sm:$0xff]
    %v121 = vld [vmem:[#allocation4 + $0x8] sm:$0xff]
    %v125 = vunpack.c.l.s4 1966171168
    %v126 = vunpack.c.0.s8 %v125
    %v127 = vlaneseq
    %v128 = vshrl.u32 %v127, 7
    %v129 = vsub.s32 %v126, %v128
    %v130 = vrot.slane %v120, %v129
    %v132 = vunpack.c.l.s4 1966171168
    %v133 = vunpack.c.0.s8 %v132
    %v134 = vlaneseq
    %v135 = vshrl.u32 %v134, 7
    %v136 = vsub.s32 %v133, %v135
    %v137 = vrot.slane %v121, %v136
    %v138 = vcombine.low %v130, %v137
    %v139 = vcombine.high %v130, %v137
    %s142 = scalar_lea.vmem %s6, 1
    %143 = vst [vmem:[%s142] ss:$4 sm:$0xff] %v138
    %s144 = scalar_lea.vmem %s6, 33
    %145 = vst [vmem:[%s144] ss:$4 sm:$0xff] %v139
    %v146 = vld [vmem:[#allocation6] sm:$0xff]
    %v147 = vld [vmem:[#allocation6 + $0x8] sm:$0xff]
    %v151 = vunpack.c.l.s4 1966171168
    %v152 = vunpack.c.0.s8 %v151
    %v153 = vlaneseq
    %v154 = vshrl.u32 %v153, 7
    %v155 = vsub.s32 %v152, %v154
    %v156 = vrot.slane %v146, %v155
    %v158 = vunpack.c.l.s4 1966171168
    %v159 = vunpack.c.0.s8 %v158
    %v160 = vlaneseq
    %v161 = vshrl.u32 %v160, 7
    %v162 = vsub.s32 %v159, %v161
    %v163 = vrot.slane %v147, %v162
    %v164 = vcombine.low %v156, %v163
    %v165 = vcombine.high %v156, %v163
    %s168 = scalar_lea.vmem %s6, 2
    %169 = vst [vmem:[%s168] ss:$4 sm:$0xff] %v164
    %s170 = scalar_lea.vmem %s6, 34
    %171 = vst [vmem:[%s170] ss:$4 sm:$0xff] %v165
    %v172 = vld [vmem:[#allocation7] sm:$0xff]
    %v173 = vld [vmem:[#allocation7 + $0x8] sm:$0xff]
    %v177 = vunpack.c.l.s4 1966171168
    %v178 = vunpack.c.0.s8 %v177
    %v179 = vlaneseq
    %v180 = vshrl.u32 %v179, 7
    %v181 = vsub.s32 %v178, %v180
    %v182 = vrot.slane %v172, %v181
    %v184 = vunpack.c.l.s4 1966171168
    %v185 = vunpack.c.0.s8 %v184
    %v186 = vlaneseq
    %v187 = vshrl.u32 %v186, 7
    %v188 = vsub.s32 %v185, %v187
    %v189 = vrot.slane %v173, %v188
    %v190 = vcombine.low %v182, %v189
    %v191 = vcombine.high %v182, %v189
    %194 = vst [vmem:[%s7] ss:$4 sm:$0xff] %v190
    %s195 = scalar_lea.vmem %s7, 32
    %196 = vst [vmem:[%s195] ss:$4 sm:$0xff] %v191
    %v197 = vld [vmem:[#allocation9] sm:$0xff]
    %v198 = vld [vmem:[#allocation9 + $0x8] sm:$0xff]
    %v202 = vunpack.c.l.s4 1966171168
    %v203 = vunpack.c.0.s8 %v202
    %v204 = vlaneseq
    %v205 = vshrl.u32 %v204, 7
    %v206 = vsub.s32 %v203, %v205
    %v207 = vrot.slane %v197, %v206
    %v209 = vunpack.c.l.s4 1966171168
    %v210 = vunpack.c.0.s8 %v209
    %v211 = vlaneseq
    %v212 = vshrl.u32 %v211, 7
    %v213 = vsub.s32 %v210, %v212
    %v214 = vrot.slane %v198, %v213
    %v215 = vcombine.low %v207, %v214
    %v216 = vcombine.high %v207, %v214
    %s219 = scalar_lea.vmem %s7, 1
    %220 = vst [vmem:[%s219] ss:$4 sm:$0xff] %v215
    %s221 = scalar_lea.vmem %s7, 33
    %222 = vst [vmem:[%s221] ss:$4 sm:$0xff] %v216
    %v223 = vld [vmem:[#allocation10] sm:$0xff]
    %v224 = vld [vmem:[#allocation10 + $0x8] sm:$0xff]
    %v228 = vunpack.c.l.s4 1966171168
    %v229 = vunpack.c.0.s8 %v228
    %v230 = vlaneseq
    %v231 = vshrl.u32 %v230, 7
    %v232 = vsub.s32 %v229, %v231
    %v233 = vrot.slane %v223, %v232
    %v235 = vunpack.c.l.s4 1966171168
    %v236 = vunpack.c.0.s8 %v235
    %v237 = vlaneseq
    %v238 = vshrl.u32 %v237, 7
    %v239 = vsub.s32 %v236, %v238
    %v240 = vrot.slane %v224, %v239
    %v241 = vcombine.low %v233, %v240
    %v242 = vcombine.high %v233, %v240
    %s245 = scalar_lea.vmem %s7, 2
    %246 = vst [vmem:[%s245] ss:$4 sm:$0xff] %v241
    %s247 = scalar_lea.vmem %s7, 34
    %248 = vst [vmem:[%s247] ss:$4 sm:$0xff] %v242
    // Predicated region
    $region50: #{tpu_custom_call.1} parent=1 // pred_check
      _
    $region51: #{tpu_custom_call.1} parent=1 // pred_check_branch
      %250 = sbr.rel (0) target = $region53
    $region52: #{tpu_custom_call.1} parent=1 // pred_region
      _
    $region53: #{tpu_custom_call.1} parent=1 // pred_fallthru
      _
    // Predicated region
    $region54: #{tpu_custom_call.1} parent=1 // pred_check
      _
    $region55: #{tpu_custom_call.1} parent=1 // pred_check_branch
      %252 = sbr.rel (0) target = $region57
    $region56: #{tpu_custom_call.1} parent=1 // pred_region
      _
    $region57: #{tpu_custom_call.1} parent=1 // pred_fallthru
      _
    // Predicated region
    $region58: #{tpu_custom_call.1} parent=1 // pred_check
      _
    $region59: #{tpu_custom_call.1} parent=1 // pred_check_branch
      %254 = sbr.rel (0) target = $region61
    $region60: #{tpu_custom_call.1} parent=1 // pred_region
      _
    $region61: #{tpu_custom_call.1} parent=1 // pred_fallthru
      _
    // Predicated region
    $region62: #{tpu_custom_call.1} parent=1 // pred_check
      _
    $region63: #{tpu_custom_call.1} parent=1 // pred_check_branch
      %256 = sbr.rel (0) target = $region65
    $region64: #{tpu_custom_call.1} parent=1 // pred_region
      _
    $region65: #{tpu_custom_call.1} parent=1 // pred_fallthru
      _
    %257 = vsyncpa [#allocation3], 1
    %258 = vsyncpa [#allocation5], 1
    %259 = vsyncpa [#allocation8], 1
    %260 = vsyncpa [#allocation11], 1

</llo_original>
